<compile_context>
chip_gen: v7x
topology: tpu7x:2x2x1
jax: 0.10.0
libtpu: 0.0.40
codegen_flags: <defaults>
</compile_context>

<pallas_src>
import math

import jax
import jax.numpy as jnp
from jax.experimental import pallas as pl
from jax.experimental.pallas import tpu as pltpu

_GELU_C = math.sqrt(2.0 / math.pi)


def _gelu_tanh(h):
    # BERT tanh-approx GELU: 0.5*h*(1 + tanh(c*(h + 0.044715*h^3)))
    # folded as h * sigmoid(2c * h * (1 + 0.044715*h^2))   [0.5*(1+tanh(z)) == sigmoid(2z)]
    inner = (2.0 * _GELU_C) * (h * (1.0 + 0.044715 * (h * h)))
    return h * jax.nn.sigmoid(inner)


def _ffn_kernel_resident(x_ref, w1_ref, b1_ref, w2_ref, b2_ref, o_ref):
    # Weights resident in VMEM (constant block index across the row grid).
    # x_ref: (tm, d_model), w1_ref: (d_model, d_ff), w2_ref: (d_ff, d_model).
    h = jnp.dot(x_ref[...], w1_ref[...], preferred_element_type=jnp.float32)
    h = h + b1_ref[...].astype(jnp.float32)
    g = _gelu_tanh(h)
    # Dropout (eval mode) == identity.
    out = jnp.dot(g.astype(w2_ref.dtype), w2_ref[...],
                  preferred_element_type=jnp.float32)
    o_ref[...] = (out + b2_ref[...].astype(jnp.float32)).astype(o_ref.dtype)


def _ffn_kernel_streamed(x_ref, w1_ref, b1_ref, w2_ref, b2_ref, o_ref, acc_ref):
    # d_ff streamed in chunks of tf along grid axis 1 ("arbitrary"); f32 VMEM
    # accumulator resident across the k steps of one row tile.
    k = pl.program_id(1)

    @pl.when(k == 0)
    def _():
        acc_ref[...] = jnp.zeros_like(acc_ref)

    h = jnp.dot(x_ref[...], w1_ref[...], preferred_element_type=jnp.float32)
    h = h + b1_ref[...].astype(jnp.float32)
    g = _gelu_tanh(h)
    # Dropout (eval mode) == identity.
    acc_ref[...] += jnp.dot(g.astype(w2_ref.dtype), w2_ref[...],
                            preferred_element_type=jnp.float32)

    @pl.when(k == pl.num_programs(1) - 1)
    def _():
        o_ref[...] = (acc_ref[...]
                      + b2_ref[...].astype(jnp.float32)).astype(o_ref.dtype)


def _round_up(n, m):
    return -(-n // m) * m


def positionwise_feed_forward(x, w1, b1, w2, b2, *, tm=None, tf=None,
                              cast_matmuls_to_bf16=False):
    """x: [B, S, d_model] -> [B, S, d_model].  w1: [d_model, d_ff], w2: [d_ff, d_model]."""
    orig_dtype = x.dtype
    B, S, d_model = x.shape
    d_ff = w1.shape[1]
    M = B * S

    if cast_matmuls_to_bf16:
        # Opt-in: bf16 MXU operands with f32 accumulation (changes numerics).
        x = x.astype(jnp.bfloat16)
        w1 = w1.astype(jnp.bfloat16)
        w2 = w2.astype(jnp.bfloat16)

    itm = jnp.dtype(x.dtype).itemsize
    itw = jnp.dtype(w1.dtype).itemsize
    pack = 8 if itm == 4 else 16

    # ---- per-generation VMEM budget -------------------------------------
    try:
        phys_vmem = int(pltpu.get_tpu_info().vmem_capacity_bytes)
    except Exception:
        phys_vmem = 64 * 1024 * 1024          # conservative (v7x per-TC VMEM)
    two_core_chip = phys_vmem <= 80 * 1024 * 1024   # v7x-like: 64 MiB/TC, 2 TCs
    vmem_cap = int(0.78 * phys_vmem)          # ~50 MiB (v7x), ~100 MiB (v5e/v6e)

    # ---- row tile --------------------------------------------------------
    if tm is None:
        # v7x (HBM ~3.2 TB/s) hides streamed-weight DMA already at tm=512;
        # v5e/v6e need ~1024 and have 128 MiB VMEM to afford it.
        tm = 512 if two_core_chip else 1024
    tm = max(pack, min(tm, _round_up(M, pack)))
    tm = _round_up(tm, pack)
    # On a 2-TC chip make sure the "parallel" row axis has >= 2 tiles so it
    # really shards across both TensorCores.
    if two_core_chip and _round_up(M, tm) // tm < 2 and tm > pack:
        tm_half = max(pack, _round_up(tm // 2, pack))
        if _round_up(M, tm_half) // tm_half >= 2:
            tm = tm_half

    # ---- VMEM footprint model -------------------------------------------
    def _footprint(tm_, tf_, w_bufs, with_acc):
        f = 4 * tm_ * d_model * itm                              # x + out (double-buffered)
        f += w_bufs * (2 * d_model * tf_ + tf_ + d_model) * itw  # W1, W2, b1, b2
        f += (tm_ * d_model * 4) if with_acc else 0              # f32 accumulator scratch
        f += 2 * tm_ * tf_ * 4                                   # f32 h / GELU intermediates
        return f

    w_total_bytes = (w1.size + w2.size + b1.size + b2.size) * itw
    # Only bother dropping to a single weight buffer when the weights are big
    # enough for the dead second buffer to matter.
    single_buffer_weights = w_total_bytes >= (2 << 20)
    w_bufs_res = 1 if single_buffer_weights else 2

    force_stream = (tf is not None) and (tf < d_ff)
    resident = (not force_stream) and (
        _footprint(tm, d_ff, w_bufs_res, with_acc=False) <= vmem_cap)

    # ---- d_ff tiling (streamed path only) --------------------------------
    if resident:
        tf_sel = d_ff
        d_ff_pad = d_ff
    else:
        tf_max = tf if tf is not None else 1024
        tf_max = max(128, (min(tf_max, _round_up(d_ff, 128)) // 128) * 128)
        aligned = list(range(128, tf_max + 1, 128))
        divisors = [t for t in aligned if d_ff % t == 0]
        cands = sorted(divisors if divisors else aligned, reverse=True)
        tf_sel = cands[-1]                       # smallest candidate as fallback
        for t in cands:                          # largest tf that fits the budget
            if _footprint(tm, t, 2, with_acc=True) <= vmem_cap:
                tf_sel = t
                break
        # If even the smallest d_ff chunk overflows, shrink the row tile.
        while _footprint(tm, tf_sel, 2, with_acc=True) > vmem_cap and tm > pack:
            tm = max(pack, _round_up(tm // 2, pack))
        d_ff_pad = _round_up(d_ff, tf_sel)

    # Zero-pad d_ff if the chunk does not divide it (padded columns of W1/b1
    # and rows of W2 are zero -> contribute exactly nothing).
    if d_ff_pad != d_ff:
        w1 = jnp.pad(w1, ((0, 0), (0, d_ff_pad - d_ff)))
        b1 = jnp.pad(b1, ((0, d_ff_pad - d_ff),))
        w2 = jnp.pad(w2, ((0, d_ff_pad - d_ff), (0, 0)))

    # ---- row padding ------------------------------------------------------
    M_pad = _round_up(M, tm)
    x2d = x.reshape(M, d_model)
    if M_pad != M:
        x2d = jnp.pad(x2d, ((0, M_pad - M), (0, 0)))
    b1_2d = b1.reshape(1, d_ff_pad)
    b2_2d = b2.reshape(1, d_model)
    n_row_tiles = M_pad // tm

    # ---- grid spec ---------------------------------------------------------
    if resident:
        n_ff_tiles = 1
        w_pipe = ({"pipeline_mode": pl.Buffered(1)}
                  if single_buffer_weights else {})
        grid_spec = pltpu.PrefetchScalarGridSpec(
            num_scalar_prefetch=0,
            grid=(n_row_tiles,),
            in_specs=[
                pl.BlockSpec((tm, d_model), lambda i: (i, 0)),              # x rows
                pl.BlockSpec((d_model, d_ff_pad), lambda i: (0, 0), **w_pipe),  # W1
                pl.BlockSpec((1, d_ff_pad), lambda i: (0, 0), **w_pipe),        # b1
                pl.BlockSpec((d_ff_pad, d_model), lambda i: (0, 0), **w_pipe),  # W2
                pl.BlockSpec((1, d_model), lambda i: (0, 0), **w_pipe),         # b2
            ],
            out_specs=pl.BlockSpec((tm, d_model), lambda i: (i, 0)),
            scratch_shapes=[],
        )
        kernel = _ffn_kernel_resident
        dims = ("parallel",)
        est = _footprint(tm, d_ff_pad, w_bufs_res, with_acc=False)
        w_fetches = 1
    else:
        n_ff_tiles = d_ff_pad // tf_sel
        grid_spec = pltpu.PrefetchScalarGridSpec(
            num_scalar_prefetch=0,
            grid=(n_row_tiles, n_ff_tiles),
            in_specs=[
                pl.BlockSpec((tm, d_model), lambda i, k: (i, 0)),    # x rows
                pl.BlockSpec((d_model, tf_sel), lambda i, k: (0, k)),  # W1 chunk
                pl.BlockSpec((1, tf_sel), lambda i, k: (0, k)),        # b1 chunk
                pl.BlockSpec((tf_sel, d_model), lambda i, k: (k, 0)),  # W2 chunk
                pl.BlockSpec((1, d_model), lambda i, k: (0, 0)),       # b2
            ],
            out_specs=pl.BlockSpec((tm, d_model), lambda i, k: (i, 0)),
            scratch_shapes=[pltpu.VMEM((tm, d_model), jnp.float32)],
        )
        kernel = _ffn_kernel_streamed
        dims = ("parallel", "arbitrary")
        est = _footprint(tm, tf_sel, 2, with_acc=True)
        w_fetches = n_row_tiles

    # VMEM limit: generous for real shapes (per-generation cap) but modest for
    # tiny problems; never above the per-generation budget (headroom on v7x).
    vmem_limit = int(min(vmem_cap, max(32 * 1024 * 1024, int(1.4 * est))))

    w_bytes = (w1.size + w2.size + b1.size + b2.size) * itw
    cost = pl.CostEstimate(
        flops=4 * M_pad * d_model * d_ff_pad,
        transcendentals=M_pad * d_ff_pad,
        bytes_accessed=int(2 * M_pad * d_model * itm + w_fetches * w_bytes),
    )

    out2d = pl.pallas_call(
        kernel,
        out_shape=jax.ShapeDtypeStruct((M_pad, d_model), x.dtype),
        grid_spec=grid_spec,
        compiler_params=pltpu.CompilerParams(
            dimension_semantics=dims,
            vmem_limit_bytes=vmem_limit),
        cost_estimate=cost,
    )(x2d, w1, b1_2d, w2, b2_2d)

    if M_pad != M:
        out2d = out2d[:M]
    return out2d.reshape(B, S, d_model).astype(orig_dtype)


def _reference(x, w1, b1, w2, b2):
    h = jnp.einsum("bsd,df->bsf", x, w1) + b1
    g = 0.5 * h * (1.0 + jnp.tanh(_GELU_C * (h + 0.044715 * h ** 3)))
    return jnp.einsum("bsf,fd->bsd", g, w2) + b2


if __name__ == "__main__":
    # Small shapes: batch=2, seq=8, d_model=32, d_ff=64
    B, S, d_model, d_ff = 2, 8, 32, 64

    key = jax.random.PRNGKey(0)
    kx, kw1, kb1, kw2, kb2 = jax.random.split(key, 5)

    x = jax.random.normal(kx, (B, S, d_model), dtype=jnp.float32)
    # Deterministic parameter init (Linear-like scaling); stored as [in, out].
    w1 = jax.random.normal(kw1, (d_model, d_ff), dtype=jnp.float32) / math.sqrt(d_model)
    b1 = jax.random.normal(kb1, (d_ff,), dtype=jnp.float32) * 0.01
    w2 = jax.random.normal(kw2, (d_ff, d_model), dtype=jnp.float32) / math.sqrt(d_ff)
    b2 = jax.random.normal(kb2, (d_model,), dtype=jnp.float32) * 0.01

    out = positionwise_feed_forward(x, w1, b1, w2, b2)
    out = jax.block_until_ready(out)

    ref = _reference(x, w1, b1, w2, b2)
    assert out.shape == (B, S, d_model)
    assert jnp.allclose(out, ref, atol=1e-4, rtol=1e-4), "mismatch vs reference"

    print("KERNEL_OK")
</pallas_src>

<mosaic_0001>
module attributes {stable_mosaic.version = 11 : i64} {
  func.func @_ffn_kernel_resident(%arg0: i32, %arg1: memref<8x32xf32, #tpu.memory_space<vmem>>, %arg2: memref<32x64xf32, #tpu.memory_space<vmem>>, %arg3: memref<1x64xf32, #tpu.memory_space<vmem>>, %arg4: memref<64x32xf32, #tpu.memory_space<vmem>>, %arg5: memref<1x32xf32, #tpu.memory_space<vmem>>, %arg6: memref<8x32xf32, #tpu.memory_space<vmem>>) attributes {dimension_semantics = [#tpu.dimension_semantics<parallel>], iteration_bounds = array<i64: 2>, scalar_prefetch = 0 : i64, scratch_operands = 0 : i64, tpu.core_type = #tpu.core_type<tc>, window_params = [{transform_indices = @transform_0, window_bounds = array<i64: 8, 32>}, {pipeline_mode = #tpu.pipeline_mode<synchronous>, transform_indices = @transform_1, window_bounds = array<i64: 32, 64>}, {pipeline_mode = #tpu.pipeline_mode<synchronous>, transform_indices = @transform_2, window_bounds = array<i64: 1, 64>}, {pipeline_mode = #tpu.pipeline_mode<synchronous>, transform_indices = @transform_3, window_bounds = array<i64: 64, 32>}, {pipeline_mode = #tpu.pipeline_mode<synchronous>, transform_indices = @transform_4, window_bounds = array<i64: 1, 32>}, {transform_indices = @transform_5, window_bounds = array<i64: 8, 32>}]} {
    %c0 = arith.constant 0 : index
    %c0_0 = arith.constant 0 : index
    %0 = vector.load %arg1[%c0, %c0_0] : memref<8x32xf32, #tpu.memory_space<vmem>>, vector<8x32xf32>
    %c0_1 = arith.constant 0 : index
    %c0_2 = arith.constant 0 : index
    %1 = vector.load %arg2[%c0_1, %c0_2] : memref<32x64xf32, #tpu.memory_space<vmem>>, vector<32x64xf32>
    %cst = arith.constant dense<0.000000e+00> : vector<8x64xf32>
    %2 = tpu.matmul %0, %1, %cst {dimension_numbers = #tpu.dot_dimension_numbers<[1], [0], [0], [1], [0, 0, 1, 1], [], []>} : vector<8x32xf32>, vector<32x64xf32>, vector<8x64xf32> -> vector<8x64xf32>
    %c0_3 = arith.constant 0 : index
    %c0_4 = arith.constant 0 : index
    %3 = vector.load %arg3[%c0_3, %c0_4] : memref<1x64xf32, #tpu.memory_space<vmem>>, vector<1x64xf32>
    %4 = vector.broadcast %3 : vector<1x64xf32> to vector<8x64xf32>
    %5 = arith.addf %2, %4 : vector<8x64xf32>
    %6 = arith.mulf %5, %5 : vector<8x64xf32>
    %cst_5 = arith.constant 4.471500e-02 : f32
    %7 = vector.broadcast %cst_5 : f32 to vector<8x64xf32>
    %8 = arith.mulf %7, %6 : vector<8x64xf32>
    %cst_6 = arith.constant 1.000000e+00 : f32
    %9 = vector.broadcast %cst_6 : f32 to vector<8x64xf32>
    %10 = arith.addf %9, %8 : vector<8x64xf32>
    %11 = arith.mulf %5, %10 : vector<8x64xf32>
    %cst_7 = arith.constant 1.59576917 : f32
    %12 = vector.broadcast %cst_7 : f32 to vector<8x64xf32>
    %13 = arith.mulf %12, %11 : vector<8x64xf32>
    %14 = arith.negf %13 : vector<8x64xf32>
    %15 = math.exp %14 : vector<8x64xf32>
    %cst_8 = arith.constant 1.000000e+00 : f32
    %16 = vector.broadcast %cst_8 : f32 to vector<8x64xf32>
    %17 = arith.addf %16, %15 : vector<8x64xf32>
    %18 = arith.divf %16, %17 : vector<8x64xf32>
    %19 = arith.mulf %5, %18 : vector<8x64xf32>
    %c0_9 = arith.constant 0 : index
    %c0_10 = arith.constant 0 : index
    %20 = vector.load %arg4[%c0_9, %c0_10] : memref<64x32xf32, #tpu.memory_space<vmem>>, vector<64x32xf32>
    %cst_11 = arith.constant dense<0.000000e+00> : vector<8x32xf32>
    %21 = tpu.matmul %19, %20, %cst_11 {dimension_numbers = #tpu.dot_dimension_numbers<[1], [0], [0], [1], [0, 0, 1, 1], [], []>} : vector<8x64xf32>, vector<64x32xf32>, vector<8x32xf32> -> vector<8x32xf32>
    %c0_12 = arith.constant 0 : index
    %c0_13 = arith.constant 0 : index
    %22 = vector.load %arg5[%c0_12, %c0_13] : memref<1x32xf32, #tpu.memory_space<vmem>>, vector<1x32xf32>
    %23 = vector.broadcast %22 : vector<1x32xf32> to vector<8x32xf32>
    %24 = arith.addf %21, %23 : vector<8x32xf32>
    %c0_14 = arith.constant 0 : index
    %c0_15 = arith.constant 0 : index
    %25 = vector.load %arg6[%c0_14, %c0_15] : memref<8x32xf32, #tpu.memory_space<vmem>>, vector<8x32xf32>
    tpu.vector_store %arg6[%c0_14, %c0_15], %24 {strides = array<i32>} : memref<8x32xf32, #tpu.memory_space<vmem>>, vector<8x32xf32>,
    return
  }
  func.func @transform_0(%arg0: i32) -> (i32, i32) {
    %c0_i32 = arith.constant 0 : i32
    %c0_i32_0 = arith.constant 0 : i32
    return %arg0, %c0_i32 : i32, i32
  }
  func.func @transform_1(%arg0: i32) -> (i32, i32) {
    %c0_i32 = arith.constant 0 : i32
    %c0_i32_0 = arith.constant 0 : i32
    %c0_i32_1 = arith.constant 0 : i32
    return %c0_i32, %c0_i32_0 : i32, i32
  }
  func.func @transform_2(%arg0: i32) -> (i32, i32) {
    %c0_i32 = arith.constant 0 : i32
    %c0_i32_0 = arith.constant 0 : i32
    %c0_i32_1 = arith.constant 0 : i32
    return %c0_i32, %c0_i32_0 : i32, i32
  }
  func.func @transform_3(%arg0: i32) -> (i32, i32) {
    %c0_i32 = arith.constant 0 : i32
    %c0_i32_0 = arith.constant 0 : i32
    %c0_i32_1 = arith.constant 0 : i32
    return %c0_i32, %c0_i32_0 : i32, i32
  }
  func.func @transform_4(%arg0: i32) -> (i32, i32) {
    %c0_i32 = arith.constant 0 : i32
    %c0_i32_0 = arith.constant 0 : i32
    %c0_i32_1 = arith.constant 0 : i32
    return %c0_i32, %c0_i32_0 : i32, i32
  }
  func.func @transform_5(%arg0: i32) -> (i32, i32) {
    %c0_i32 = arith.constant 0 : i32
    %c0_i32_0 = arith.constant 0 : i32
    return %arg0, %c0_i32 : i32, i32
  }
}

</mosaic_0001>

<llo_original>
// kernel: tpu_custom_call.1
$region0: #{tpu_custom_call.1}
  #allocation0 [shape = 'u32[]', space=smem, size = 0x4, offset = 0x4, fixed_abs, tag = 'smem constant byte address 0x4 - core index']
  #allocation1 [shape = 'u32[144,128]{1,0:T(1,128)}', space=vmem, size = 0x12000, scoped, tag = 'internal scratch']
  %s0 = inlined_call_operand.vmem [shape: f32[16,32], index: 0, kind: input, shape index: {}]
  %s1 = inlined_call_operand.vmem [shape: f32[32,64], index: 1, kind: input, shape index: {}]
  %s2 = inlined_call_operand.vmem [shape: f32[1,64], index: 2, kind: input, shape index: {}]
  %s3 = inlined_call_operand.vmem [shape: f32[64,32], index: 3, kind: input, shape index: {}]
  %s4 = inlined_call_operand.vmem [shape: f32[1,32], index: 4, kind: input, shape index: {}]
  %s5 = inlined_call_operand.hbm [shape: f32[16,32], index: 5, kind: output, shape index: {}]
  %s6 = sld [smem:[#allocation0]]
  $region53: #{tpu_custom_call.1} parent=0
    _
  %s8 = ssub.s32 1, %s6
  %s9 = scalar_select 0, %s8, %s6
  $region1: #{tpu_custom_call.1} parent=0
    #allocation2 [shape = 'u8[8192]{0}', space=vmem, size = 0x2000, scoped, tag = 'output window, operand 0']
    #allocation3 [shape = 's32[2]{0}', space=sflag, size = 0x8, scoped, tag = 'scoped memory for tpu_custom_call.1']
    %10 = vsyncpa [#allocation3], 0
    %s11 = scalar_lea.sflag [#allocation3], 1
    %12 = vsyncpa %s11, 0
    loop: start=0, step=1, limit=4
    $region2: #{tpu_custom_call.1} parent=1 // loop_pre_header
      _
    $region3: #{tpu_custom_call.1} parent=1 // loop_header
      %s14 = sphi 0, %s18
      %p15 = scmp.ge.s32.totalorder %s14, 4
      %s24 = sphi 0, %s26
      %s27 = sphi 0, %s24
      %s28 = sphi 0, %s27
      %s44 = sphi 0, %s28
      %s48 = sphi 0, %s48
      %s50 = sphi 0, %s48
      %s51 = sphi 0, %s50
      %s65 = sphi 0, %s51
      %s69 = sphi 0, %s69
      %s71 = sphi 0, %s69
      %s72 = sphi 0, %s71
      %s86 = sphi 0, %s72
      %s90 = sphi 0, %s90
      %s92 = sphi 0, %s90
      %s93 = sphi 0, %s92
      %s107 = sphi 0, %s93
      %s111 = sphi 0, %s111
      %s113 = sphi 0, %s111
      %s114 = sphi 0, %s113
      %s128 = sphi 0, %s114
      %s134 = sphi 0, %s136
      %s137 = sphi 0, %s134
      %s138 = sphi 0, %s137
      %s154 = sphi 0, %s138
    $region4: #{tpu_custom_call.1} parent=1 // loop_header_branch
      %17 = sbr.rel (%p15) target = $region8
    $region5: #{tpu_custom_call.1} parent=1 // loop_body
      %s19 = ssub.s32 %s14, 1
      %s20 = ssub.s32 %s14, 2
      %s21 = sadd.s32 %s14, 1
      %s22 = ssub.s32 %s14, %s21
      %p23 = scmp.eq.s32.totalorder %s22, 0
      %s25 = sadd.s32 %s24, 1
      %s26 = scalar_select %p23, %s24, %s25
      %p29 = pneg %p23
      %p30 = scmp.eq.s32.totalorder %s14, 1
      %p31 = por %p29, %p30
      %p32 = scmp.ne.s32.totalorder %s24, %s27
      %p33 = scmp.eq.s32.totalorder %s14, 0
      %p34 = por %p32, %p33
      %p35 = scmp.ne.s32.totalorder %s24, %s27
      %p36 = scmp.eq.s32.totalorder %s19, 1
      %p37 = por %p35, %p36
      %p38 = scmp.ne.s32.totalorder %s27, %s28
      %p39 = scmp.eq.s32.totalorder %s19, 0
      %p40 = por %p38, %p39
      %p41 = scmp.ne.s32.totalorder %s27, %s28
      %p42 = scmp.eq.s32.totalorder %s20, 1
      %p43 = por %p41, %p42
      %p45 = scmp.ne.s32.totalorder %s28, %s44
      %p46 = scmp.eq.s32.totalorder %s20, 0
      %p47 = por %p45, %p46
      %s49 = sadd.s32 %s48, 1
      %p52 = scmp.eq.s32.totalorder %s14, 1
      %p53 = scmp.ne.s32.totalorder %s48, %s50
      %p54 = scmp.eq.s32.totalorder %s14, 0
      %p55 = por %p53, %p54
      %p56 = scmp.ne.s32.totalorder %s48, %s50
      %p57 = scmp.eq.s32.totalorder %s19, 1
      %p58 = por %p56, %p57
      %p59 = scmp.ne.s32.totalorder %s50, %s51
      %p60 = scmp.eq.s32.totalorder %s19, 0
      %p61 = por %p59, %p60
      %p62 = scmp.ne.s32.totalorder %s50, %s51
      %p63 = scmp.eq.s32.totalorder %s20, 1
      %p64 = por %p62, %p63
      %p66 = scmp.ne.s32.totalorder %s51, %s65
      %p67 = scmp.eq.s32.totalorder %s20, 0
      %p68 = por %p66, %p67
      %s70 = sadd.s32 %s69, 1
      %p73 = scmp.eq.s32.totalorder %s14, 1
      %p74 = scmp.ne.s32.totalorder %s69, %s71
      %p75 = scmp.eq.s32.totalorder %s14, 0
      %p76 = por %p74, %p75
      %p77 = scmp.ne.s32.totalorder %s69, %s71
      %p78 = scmp.eq.s32.totalorder %s19, 1
      %p79 = por %p77, %p78
      %p80 = scmp.ne.s32.totalorder %s71, %s72
      %p81 = scmp.eq.s32.totalorder %s19, 0
      %p82 = por %p80, %p81
      %p83 = scmp.ne.s32.totalorder %s71, %s72
      %p84 = scmp.eq.s32.totalorder %s20, 1
      %p85 = por %p83, %p84
      %p87 = scmp.ne.s32.totalorder %s72, %s86
      %p88 = scmp.eq.s32.totalorder %s20, 0
      %p89 = por %p87, %p88
      %s91 = sadd.s32 %s90, 1
      %p94 = scmp.eq.s32.totalorder %s14, 1
      %p95 = scmp.ne.s32.totalorder %s90, %s92
      %p96 = scmp.eq.s32.totalorder %s14, 0
      %p97 = por %p95, %p96
      %p98 = scmp.ne.s32.totalorder %s90, %s92
      %p99 = scmp.eq.s32.totalorder %s19, 1
      %p100 = por %p98, %p99
      %p101 = scmp.ne.s32.totalorder %s92, %s93
      %p102 = scmp.eq.s32.totalorder %s19, 0
      %p103 = por %p101, %p102
      %p104 = scmp.ne.s32.totalorder %s92, %s93
      %p105 = scmp.eq.s32.totalorder %s20, 1
      %p106 = por %p104, %p105
      %p108 = scmp.ne.s32.totalorder %s93, %s107
      %p109 = scmp.eq.s32.totalorder %s20, 0
      %p110 = por %p108, %p109
      %s112 = sadd.s32 %s111, 1
      %p115 = scmp.eq.s32.totalorder %s14, 1
      %p116 = scmp.ne.s32.totalorder %s111, %s113
      %p117 = scmp.eq.s32.totalorder %s14, 0
      %p118 = por %p116, %p117
      %p119 = scmp.ne.s32.totalorder %s111, %s113
      %p120 = scmp.eq.s32.totalorder %s19, 1
      %p121 = por %p119, %p120
      %p122 = scmp.ne.s32.totalorder %s113, %s114
      %p123 = scmp.eq.s32.totalorder %s19, 0
      %p124 = por %p122, %p123
      %p125 = scmp.ne.s32.totalorder %s113, %s114
      %p126 = scmp.eq.s32.totalorder %s20, 1
      %p127 = por %p125, %p126
      %p129 = scmp.ne.s32.totalorder %s114, %s128
      %p130 = scmp.eq.s32.totalorder %s20, 0
      %p131 = por %p129, %p130
      %s132 = ssub.s32 %s14, %s21
      %p133 = scmp.eq.s32.totalorder %s132, 0
      %s135 = sadd.s32 %s134, 1
      %s136 = scalar_select %p133, %s134, %s135
      %p139 = pneg %p133
      %p140 = scmp.eq.s32.totalorder %s14, 1
      %p141 = por %p139, %p140
      %p142 = scmp.ne.s32.totalorder %s134, %s137
      %p143 = scmp.eq.s32.totalorder %s14, 0
      %p144 = por %p142, %p143
      %p145 = scmp.ne.s32.totalorder %s134, %s137
      %p146 = scmp.eq.s32.totalorder %s19, 1
      %p147 = por %p145, %p146
      %p148 = scmp.ne.s32.totalorder %s137, %s138
      %p149 = scmp.eq.s32.totalorder %s19, 0
      %p150 = por %p148, %p149
      %p151 = scmp.ne.s32.totalorder %s137, %s138
      %p152 = scmp.eq.s32.totalorder %s20, 1
      %p153 = por %p151, %p152
      %p155 = scmp.ne.s32.totalorder %s138, %s154
      %p156 = scmp.eq.s32.totalorder %s20, 0
      %p157 = por %p155, %p156
      %p158 = scmp.le.s32.totalorder 1, %s14
      %p159 = scmp.lt.s32.totalorder %s14, 3
      %p160 = pnand %p158, %p159
      %p161 = pneg %p160
      // Predicated region
      $region9: #{tpu_custom_call.1} parent=5 // pred_check
        _
      $region10: #{tpu_custom_call.1} parent=5 // pred_check_branch
        %163 = sbr.rel (%p160) target = $region12
      $region11: #{tpu_custom_call.1} parent=5 // pred_region
        %s164 = ssub.s32 %s14, 1
        // Predicated region
        $region13: #{tpu_custom_call.1} parent=11 // pred_check
          %p165 = pneg %p61
        $region14: #{tpu_custom_call.1} parent=11 // pred_check_branch
          %167 = sbr.rel (%p165) target = $region16
        $region15: #{tpu_custom_call.1} parent=11 // pred_region
          _
        $region16: #{tpu_custom_call.1} parent=11 // pred_fallthru
          _
        // Predicated region
        $region17: #{tpu_custom_call.1} parent=11 // pred_check
          %p168 = pneg %p82
        $region18: #{tpu_custom_call.1} parent=11 // pred_check_branch
          %170 = sbr.rel (%p168) target = $region20
        $region19: #{tpu_custom_call.1} parent=11 // pred_region
          _
        $region20: #{tpu_custom_call.1} parent=11 // pred_fallthru
          _
        // Predicated region
        $region21: #{tpu_custom_call.1} parent=11 // pred_check
          %p171 = pneg %p103
        $region22: #{tpu_custom_call.1} parent=11 // pred_check_branch
          %173 = sbr.rel (%p171) target = $region24
        $region23: #{tpu_custom_call.1} parent=11 // pred_region
          _
        $region24: #{tpu_custom_call.1} parent=11 // pred_fallthru
          _
        // Predicated region
        $region25: #{tpu_custom_call.1} parent=11 // pred_check
          %p174 = pneg %p124
        $region26: #{tpu_custom_call.1} parent=11 // pred_check_branch
          %176 = sbr.rel (%p174) target = $region28
        $region27: #{tpu_custom_call.1} parent=11 // pred_region
          _
        $region28: #{tpu_custom_call.1} parent=11 // pred_fallthru
          _
      $region12: #{tpu_custom_call.1} parent=5 // pred_fallthru
        _
      %p177 = scmp.lt.s32.totalorder %s14, 2
      // Predicated region
      $region29: #{tpu_custom_call.1} parent=5 // pred_check
        %p178 = pneg %p177
      $region30: #{tpu_custom_call.1} parent=5 // pred_check_branch
        %180 = sbr.rel (%p178) target = $region32
      $region31: #{tpu_custom_call.1} parent=5 // pred_region
        // Predicated region
        $region33: #{tpu_custom_call.1} parent=31 // pred_check
          %p181 = pneg %p34
        $region34: #{tpu_custom_call.1} parent=31 // pred_check_branch
          %183 = sbr.rel (%p181) target = $region36
        $region35: #{tpu_custom_call.1} parent=31 // pred_region
          %p184 = scmp.lt.s32.totalorder %s14, 1
          %s185 = scalar_select %p184, %s14, 1
          %s186 = smul.addr %s185, 8
          %s187 = scalar_lea.vmem %s0, %s186
        $region36: #{tpu_custom_call.1} parent=31 // pred_fallthru
          _
      $region32: #{tpu_custom_call.1} parent=5 // pred_fallthru
        _
      %p188 = scmp.le.s32.totalorder 1, %s14
      %p189 = scmp.lt.s32.totalorder %s14, 3
      %p190 = pnand %p188, %p189
      %p191 = pneg %p190
      // Predicated region
      $region37: #{tpu_custom_call.1} parent=5 // pred_check
        _
      $region38: #{tpu_custom_call.1} parent=5 // pred_check_branch
        %193 = sbr.rel (%p190) target = $region40
      $region39: #{tpu_custom_call.1} parent=5 // pred_region
        %s194 = ssub.s32 %s14, 1
        %p195 = scmp.lt.s32.totalorder %s19, 1
        %s196 = scalar_select %p195, %s19, 1
        %s197 = smul.addr %s196, 8
        %s198 = scalar_lea.vmem %s0, %s197
        %p199 = pneg %p40
        %p200 = pneg %p37
        %p201 = pneg %p61
        %p202 = pneg %p58
        %p203 = pneg %p82
        %p204 = pneg %p79
        %p205 = pneg %p103
        %p206 = pneg %p100
        %p207 = pneg %p124
        %p208 = pneg %p121
        %p209 = pneg %p150
        %p210 = pneg %p147
        %s211 = sand.u32 %s137, 1
        %s212 = scalar_lea.sflag [#allocation3], %s211
        %s213 = sand.u32 %s137, 1
        %s214 = smul.addr %s213, 8
        %s215 = scalar_lea.vmem [#allocation2], %s214
        %p216 = scmp.lt.s32.totalorder %s19, 1
        %s217 = scalar_select %p216, %s19, 1
        %s218 = smul.addr %s217, 8
        %s219 = scalar_lea.vmem %s0, %s218
        %v220 = vld [vmem:[%s219] sm:$0xff]
        %v221 = vld [vmem:[%s1] sm:$0xff]
        %v222 = vld [vmem:[%s1 + $0x8] sm:$0xff]
        %v223 = vld [vmem:[%s1 + $0x10] sm:$0xff]
        %v224 = vld [vmem:[%s1 + $0x18] sm:$0xff]
        %v225 = vld [vmem:[%s2] sm:$0x1]
        %v227 = vlaneseq
        %v228 = vshrl.u32 %v227, 7
        %v229 = vsub.s32 0, %v228
        %v230 = vrot.slane %v225, %v229
        %vm232 = vcmask 261120
        %v234 = vsel %vm232, %v220, 0
        %236 = vmatprep.subr.mxu0 0.0
        %237 = vmatpush1.msra.mxu0 %v221
        %238 = vmatprep.subr.mxu0 0.0
        %239 = vmatpush1.msra.mxu0 %v222
        %240 = vmatprep.subr.mxu0 0.0
        %241 = vmatpush1.msra.mxu0 %v223
        %242 = vmatprep.subr.mxu0 0.0
        %243 = vmatpush1.msra.mxu0 %v224
        %244 = vmatprep.subr.mxu0 0.0
        %245 = vmatpush1.msra.mxu0 0.0
        %246 = vmatprep.subr.mxu0 0.0
        %247 = vmatpush1.msra.mxu0 0.0
        %248 = vmatprep.subr.mxu0 0.0
        %249 = vmatpush1.msra.mxu0 0.0
        %250 = vmatprep.subr.mxu0 0.0
        %251 = vmatpush1.msra.mxu0 0.0
        %252 = vmatprep.subr.mxu0 0.0
        %253 = vmatpush1.msra.mxu0 0.0
        %254 = vmatprep.subr.mxu0 0.0
        %255 = vmatpush1.msra.mxu0 0.0
        %256 = vmatprep.subr.mxu0 0.0
        %257 = vmatpush1.msra.mxu0 0.0
        %258 = vmatprep.subr.mxu0 0.0
        %259 = vmatpush1.msra.mxu0 0.0
        %260 = vmatprep.subr.mxu0 0.0
        %261 = vmatpush1.msra.mxu0 0.0
        %262 = vmatprep.subr.mxu0 0.0
        %263 = vmatpush1.msra.mxu0 0.0
        %264 = vmatprep.subr.mxu0 0.0
        %265 = vmatpush1.msra.mxu0 0.0
        %266 = vmatprep.subr.mxu0 0.0
        %267 = vmatpush1.msra.mxu0 0.0
        %268 = vmatprep.subr.mxu0 0.0
        %269 = vmatpush1.msra.mxu0 0.0
        %270 = vmatprep.subr.mxu0 0.0
        %271 = vmatpush1.msra.mxu0 0.0
        %272 = vmatprep.subr.mxu0 0.0
        %273 = vmatpush1.msra.mxu0 0.0
        %274 = vmatprep.subr.mxu0 0.0
        %275 = vmatpush1.msra.mxu0 0.0
        %276 = vmatprep.subr.mxu0 0.0
        %277 = vmatpush1.msra.mxu0 0.0
        %278 = vmatprep.subr.mxu0 0.0
        %279 = vmatpush1.msra.mxu0 0.0
        %280 = vmatprep.subr.mxu0 0.0
        %281 = vmatpush1.msra.mxu0 0.0
        %282 = vmatprep.subr.mxu0 0.0
        %283 = vmatpush1.msra.mxu0 0.0
        %284 = vmatprep.subr.mxu0 0.0
        %285 = vmatpush1.msra.mxu0 0.0
        %286 = vmatprep.subr.mxu0 0.0
        %287 = vmatpush1.msra.mxu0 0.0
        %288 = vmatprep.subr.mxu0 0.0
        %289 = vmatpush1.msra.mxu0 0.0
        %290 = vmatprep.subr.mxu0 0.0
        %291 = vmatpush1.msra.mxu0 0.0
        %292 = vmatprep.subr.mxu0 0.0
        %293 = vmatpush1.msra.mxu0 0.0
        %294 = vmatprep.subr.mxu0 0.0
        %295 = vmatpush1.msra.mxu0 0.0
        %296 = vmatprep.subr.mxu0 0.0
        %297 = vmatpush1.msra.mxu0 0.0
        %298 = vmatprep.subr.mxu0 0.0
        %299 = vmatpush1.msra.mxu0 0.0
        %300 = vmatprep.mubr.f32.mxu0 0.0
        %301 = vmatmul.mubr.f32.gmra.mrb[0].mxu0 %v234
        %v302 = vpop.f32.mrb[0].mxu0
        %v303 = vadd.f32 %v230, %v302
        %v304 = vpop.f32.mrb[0].mxu0
        %305 = vdwg.mxu0
        %v306 = vmul.f32 %v303, %v303
        %v307 = vmul.f32 %v306, 0.044715
        %v308 = vadd.f32 %v307, 1.0
        %v309 = vmul.f32 %v303, %v308
        %v310 = vmul.f32 %v309, 1.5957692
        %v311 = vxor.u32 %v310, 2147483648
        %v312 = vmul.f32 %v311, 1.442695
        %v313 = vpow.pop %v312
        %v314 = vadd.f32 %v313, 1.0
        %v315 = vrcp.pop %v314
        %v316 = vmul.f32 1.0, %v315
        %v317 = vmul.f32 %v303, %v316
        %v318 = vld [vmem:[%s3] sm:$0xff]
        %v319 = vld [vmem:[%s3 + $0x8] sm:$0xff]
        %v320 = vld [vmem:[%s3 + $0x10] sm:$0xff]
        %v321 = vld [vmem:[%s3 + $0x18] sm:$0xff]
        %v322 = vld [vmem:[%s3 + $0x20] sm:$0xff]
        %v323 = vld [vmem:[%s3 + $0x28] sm:$0xff]
        %v324 = vld [vmem:[%s3 + $0x30] sm:$0xff]
        %v325 = vld [vmem:[%s3 + $0x38] sm:$0xff]
        %v326 = vld [vmem:[%s4] sm:$0x1]
        %v328 = vlaneseq
        %v329 = vshrl.u32 %v328, 7
        %v330 = vsub.s32 0, %v329
        %v331 = vrot.slane %v326, %v330
        %vm333 = vcmask 523264
        %v335 = vsel %vm333, %v317, 0
        %337 = vmatprep.subr.mxu0 0.0
        %338 = vmatpush1.msra.mxu0 %v318
        %339 = vmatprep.subr.mxu0 0.0
        %340 = vmatpush1.msra.mxu0 %v319
        %341 = vmatprep.subr.mxu0 0.0
        %342 = vmatpush1.msra.mxu0 %v320
        %343 = vmatprep.subr.mxu0 0.0
        %344 = vmatpush1.msra.mxu0 %v321
        %345 = vmatprep.subr.mxu0 0.0
        %346 = vmatpush1.msra.mxu0 %v322
        %347 = vmatprep.subr.mxu0 0.0
        %348 = vmatpush1.msra.mxu0 %v323
        %349 = vmatprep.subr.mxu0 0.0
        %350 = vmatpush1.msra.mxu0 %v324
        %351 = vmatprep.subr.mxu0 0.0
        %352 = vmatpush1.msra.mxu0 %v325
        %353 = vmatprep.subr.mxu0 0.0
        %354 = vmatpush1.msra.mxu0 0.0
        %355 = vmatprep.subr.mxu0 0.0
        %356 = vmatpush1.msra.mxu0 0.0
        %357 = vmatprep.subr.mxu0 0.0
        %358 = vmatpush1.msra.mxu0 0.0
        %359 = vmatprep.subr.mxu0 0.0
        %360 = vmatpush1.msra.mxu0 0.0
        %361 = vmatprep.subr.mxu0 0.0
        %362 = vmatpush1.msra.mxu0 0.0
        %363 = vmatprep.subr.mxu0 0.0
        %364 = vmatpush1.msra.mxu0 0.0
        %365 = vmatprep.subr.mxu0 0.0
        %366 = vmatpush1.msra.mxu0 0.0
        %367 = vmatprep.subr.mxu0 0.0
        %368 = vmatpush1.msra.mxu0 0.0
        %369 = vmatprep.subr.mxu0 0.0
        %370 = vmatpush1.msra.mxu0 0.0
        %371 = vmatprep.subr.mxu0 0.0
        %372 = vmatpush1.msra.mxu0 0.0
        %373 = vmatprep.subr.mxu0 0.0
        %374 = vmatpush1.msra.mxu0 0.0
        %375 = vmatprep.subr.mxu0 0.0
        %376 = vmatpush1.msra.mxu0 0.0
        %377 = vmatprep.subr.mxu0 0.0
        %378 = vmatpush1.msra.mxu0 0.0
        %379 = vmatprep.subr.mxu0 0.0
        %380 = vmatpush1.msra.mxu0 0.0
        %381 = vmatprep.subr.mxu0 0.0
        %382 = vmatpush1.msra.mxu0 0.0
        %383 = vmatprep.subr.mxu0 0.0
        %384 = vmatpush1.msra.mxu0 0.0
        %385 = vmatprep.subr.mxu0 0.0
        %386 = vmatpush1.msra.mxu0 0.0
        %387 = vmatprep.subr.mxu0 0.0
        %388 = vmatpush1.msra.mxu0 0.0
        %389 = vmatprep.subr.mxu0 0.0
        %390 = vmatpush1.msra.mxu0 0.0
        %391 = vmatprep.subr.mxu0 0.0
        %392 = vmatpush1.msra.mxu0 0.0
        %393 = vmatprep.subr.mxu0 0.0
        %394 = vmatpush1.msra.mxu0 0.0
        %395 = vmatprep.subr.mxu0 0.0
        %396 = vmatpush1.msra.mxu0 0.0
        %397 = vmatprep.subr.mxu0 0.0
        %398 = vmatpush1.msra.mxu0 0.0
        %399 = vmatprep.subr.mxu0 0.0
        %400 = vmatpush1.msra.mxu0 0.0
        %401 = vmatprep.mubr.f32.mxu0 0.0
        %402 = vmatmul.mubr.f32.gmra.mrb[0].mxu0 %v335
        %v403 = vpop.f32.mrb[0].mxu0
        %v404 = vadd.f32 %v331, %v403
        %v405 = vpop.f32.mrb[0].mxu0
        %406 = vdwg.mxu0
        %407 = vst.msk [vmem:[%s215] sm:$0xff] %vm232, %v404
        %s408 = sand.u32 %s137, 1
        %s409 = scalar_lea.sflag [#allocation3], %s408
        %s410 = sand.u32 %s137, 1
        %s411 = smul.addr %s410, 8
        %s412 = scalar_lea.vmem [#allocation2], %s411
        // Predicated region
        $region41: #{tpu_custom_call.1} parent=39 // pred_check
          %p413 = pneg %p147
        $region42: #{tpu_custom_call.1} parent=39 // pred_check_branch
          %415 = sbr.rel (%p413) target = $region44
        $region43: #{tpu_custom_call.1} parent=39 // pred_region
          %s417 = ssub.s32 128, 128
          %418 = vsyncadd %s409, %s417
          %s419 = smul.addr %s19, 128
          %s420 = scalar_lea.hbm %s5, %s419
          %s422 = sshll.u32 %s412, 4
          %s423 = int_to_ptr.vmem [resolvable:$true] %s422
          %425 = dma.vmem_to_hbm [thread:$0]  %s423, 128, %s420, %s409
        $region44: #{tpu_custom_call.1} parent=39 // pred_fallthru
          _
      $region40: #{tpu_custom_call.1} parent=5 // pred_fallthru
        _
      %p426 = scmp.le.s32.totalorder 2, %s14
      // Predicated region
      $region45: #{tpu_custom_call.1} parent=5 // pred_check
        %p427 = pneg %p426
      $region46: #{tpu_custom_call.1} parent=5 // pred_check_branch
        %429 = sbr.rel (%p427) target = $region48
      $region47: #{tpu_custom_call.1} parent=5 // pred_region
        %s430 = ssub.s32 %s14, 2
        // Predicated region
        $region49: #{tpu_custom_call.1} parent=47 // pred_check
          %p431 = pneg %p153
        $region50: #{tpu_custom_call.1} parent=47 // pred_check_branch
          %433 = sbr.rel (%p431) target = $region52
        $region51: #{tpu_custom_call.1} parent=47 // pred_region
          %s434 = sand.u32 %s138, 1
          %s435 = scalar_lea.sflag [#allocation3], %s434
          %s436 = sand.u32 %s138, 1
          %s437 = smul.addr %s436, 8
          %s438 = scalar_lea.vmem [#allocation2], %s437
          %439 = dma.done %s435, 128
        $region52: #{tpu_custom_call.1} parent=47 // pred_fallthru
          _
      $region48: #{tpu_custom_call.1} parent=5 // pred_fallthru
        _
    $region6: #{tpu_custom_call.1} parent=1 // loop_footer
      %s18 = sadd.s32 1, %s14
    $region7: #{tpu_custom_call.1} parent=1 // loop_footer_branch
      %13 = sbr.rel target = $region3
    $region8: #{tpu_custom_call.1} parent=1 // loop_exit
      _
    %440 = vsyncpa [#allocation3], 1
    %s441 = scalar_lea.sflag [#allocation3], 1
    %442 = vsyncpa %s441, 1

</llo_original>
